<compile_context>
chip_gen: v7x
topology: tpu7x:2x2x1
jax: 0.10.0
libtpu: 0.0.40
codegen_flags: <defaults>
</compile_context>

<pallas_src>
import functools

import numpy as np
import jax
import jax.numpy as jnp
from jax.experimental import pallas as pl
from jax.experimental.pallas import tpu as pltpu


def _gaussian_1d(sigma: float, z_score_cutoff: int = 3) -> np.ndarray:
    """Normalized 1D Gaussian taps; outer(w, w) == the module's 2D kernel.

    Uses the same float arithmetic as GaussianBlur2d._get_gaussian_kernel for
    the kernel-size / tap-position computation (works for fractional sigma).
    """
    kernel_size = 2 * z_score_cutoff * sigma + 1
    if kernel_size % 2 == 0:
        kernel_size += 1
    lo = -kernel_size // 2 + 1
    hi = kernel_size // 2 + 1
    x = np.arange(lo, hi, dtype=np.float32)
    g = np.exp(-(x ** 2) / (2.0 * sigma ** 2)).astype(np.float32)
    return (g / g.sum()).astype(np.float32)


def gaussian_weights_2d(sigma: float, z_score_cutoff: int = 3) -> np.ndarray:
    """Replicates GaussianBlur2d._get_gaussian_kernel with numpy (float32)."""
    kernel_size = 2 * z_score_cutoff * sigma + 1
    if kernel_size % 2 == 0:
        kernel_size += 1
    lo = -kernel_size // 2 + 1
    hi = kernel_size // 2 + 1
    x = np.arange(lo, hi, dtype=np.float32)
    y = np.arange(lo, hi, dtype=np.float32)
    xx, yy = np.meshgrid(x, y, indexing="ij")
    k = np.exp(-(xx ** 2 + yy ** 2) / (2.0 * sigma ** 2)).astype(np.float32)
    return (k / k.sum()).astype(np.float32)


def _blur_kernel(x_ref, o_ref, tmp_ref, *, w1d, out_h, out_w):
    """Separable Gaussian blur for one block of TB padded images.

    x_ref:   (TB, H_pad, W_pad)   padded input images (VMEM)
    o_ref:   (TB, out_h, out_w)   blurred + cropped output (VMEM)
    tmp_ref: (TB, out_h, W_pad)   f32 VMEM scratch for the vertical pass
    """
    ksize = len(w1d)

    # Vertical pass: K sublane-aligned row-offset slices (cheap aligned loads),
    # f32 accumulation, weights baked as compile-time scalars.
    acc_v = w1d[0] * x_ref[:, 0:out_h, :].astype(jnp.float32)
    for dy in range(1, ksize):
        acc_v = acc_v + w1d[dy] * x_ref[:, dy:dy + out_h, :].astype(jnp.float32)
    tmp_ref[...] = acc_v

    # Horizontal pass: K lane-offset slices of the small VMEM-resident strip.
    acc_h = w1d[0] * tmp_ref[:, :, 0:out_w]
    for dx in range(1, ksize):
        acc_h = acc_h + w1d[dx] * tmp_ref[:, :, dx:dx + out_w]
    o_ref[...] = acc_h.astype(o_ref.dtype)


def _pick_block_images(nc, hp, wp, out_h, out_w, itemsize,
                       vmem_budget_bytes=8 << 20):
    """Choose images-per-grid-step TB.

    Big enough to amortize the ~600-cycle per-grid-step overhead, small enough
    that (double-buffered input + output) + f32 scratch stays well inside VMEM
    on every generation, and capped so the grid keeps >= 2 steps when possible
    (v7x has 2 TensorCores sharding a "parallel" grid axis).  TB must divide nc.
    """
    per_img = 2 * (hp * wp + out_h * out_w) * itemsize + out_h * wp * 4
    cap = max(1, int(vmem_budget_bytes // max(per_img, 1)))
    if nc >= 2:
        cap = min(cap, nc // 2)
    cap = min(cap, nc)
    tb = 1
    for d in range(1, cap + 1):
        if nc % d == 0:
            tb = d
    return tb


def gaussian_blur2d(x, sigma: float, z_score_cutoff: int = 3,
                    reflect_padding: bool = True, block_images: int | None = None,
                    vmem_limit_bytes: int = 48 * 1024 * 1024):
    """Exact forward of GaussianBlur2d for NCHW float inputs (C must be 1)."""
    w1d = _gaussian_1d(sigma, z_score_cutoff)            # (K,) numpy float32
    K = w1d.shape[0]
    n, c, h, w = x.shape
    assert c == 1, (
        "GaussianBlur2d uses a (1,1,K,K) conv weight with groups=1, which "
        f"requires a single input channel; got C={c}."
    )

    # _compute_padding: (left, right, top, bottom) in torch F.pad convention.
    h_even = int(h % 2 == 0)
    w_even = int(w % 2 == 0)
    pad_t, pad_b = K // 2, K // 2 + h_even
    pad_l, pad_r = K // 2, K // 2 + w_even
    mode = "reflect" if reflect_padding else "constant"
    xp = jnp.pad(x, ((0, 0), (0, 0), (pad_t, pad_b), (pad_l, pad_r)), mode=mode)

    hp, wp = xp.shape[-2], xp.shape[-1]
    conv_h = hp - K + 1
    conv_w = wp - K + 1
    # Post-conv crop logic from the module: drop 2 if the conv-output dim is
    # even, else drop 1.  We compute only the kept region directly.
    out_h = conv_h - (2 if conv_h % 2 == 0 else 1)
    out_w = conv_w - (2 if conv_w % 2 == 0 else 1)

    nc = n * c
    xp_flat = xp.reshape(nc, hp, wp)

    if block_images is None:
        tb = _pick_block_images(nc, hp, wp, out_h, out_w,
                                itemsize=np.dtype(x.dtype).itemsize)
    else:
        tb = block_images
    assert nc % tb == 0

    kernel = functools.partial(
        _blur_kernel,
        w1d=tuple(float(v) for v in w1d),
        out_h=out_h,
        out_w=out_w,
    )

    out = pl.pallas_call(
        kernel,
        out_shape=jax.ShapeDtypeStruct((nc, out_h, out_w), x.dtype),
        grid_spec=pltpu.PrefetchScalarGridSpec(
            num_scalar_prefetch=0,
            grid=(nc // tb,),
            in_specs=[pl.BlockSpec((tb, hp, wp), lambda i: (i, 0, 0))],
            out_specs=pl.BlockSpec((tb, out_h, out_w), lambda i: (i, 0, 0)),
            scratch_shapes=[pltpu.VMEM((tb, out_h, wp), jnp.float32)],
        ),
        compiler_params=pltpu.CompilerParams(
            dimension_semantics=("parallel",),
            vmem_limit_bytes=vmem_limit_bytes,
        ),
    )(xp_flat)

    return out.reshape(n, c, out_h, out_w)


def _reference_forward(x, sigma: float, z_score_cutoff: int = 3,
                       reflect_padding: bool = True):
    """Pure-JAX reference mirroring the PyTorch forward (for validation)."""
    kern = jnp.asarray(gaussian_weights_2d(sigma, z_score_cutoff))
    K = kern.shape[0]
    h_even = int(x.shape[-2] % 2 == 0)
    w_even = int(x.shape[-1] % 2 == 0)
    mode = "reflect" if reflect_padding else "constant"
    xp = jnp.pad(
        x, ((0, 0), (0, 0), (K // 2, K // 2 + h_even), (K // 2, K // 2 + w_even)),
        mode=mode,
    )
    y = jax.lax.conv_general_dilated(
        xp, kern[None, None], (1, 1), "VALID",
        dimension_numbers=("NCHW", "OIHW", "NCHW"),
        precision=jax.lax.Precision.HIGHEST,
    )
    ch, cw = y.shape[-2], y.shape[-1]
    y = y[:, :, : ch - (2 if ch % 2 == 0 else 1), : cw - (2 if cw % 2 == 0 else 1)]
    return y


if __name__ == "__main__":
    sigma = 1.0  # -> 7x7 Gaussian kernel (z_score_cutoff=3)
    key = jax.random.PRNGKey(0)
    # NCHW, C=1 as the module's (1,1,K,K)/groups=1 conv requires.
    x = jax.random.normal(key, (4, 1, 16, 16), dtype=jnp.float32)

    out = jax.block_until_ready(gaussian_blur2d(x, sigma))
    assert out.shape == (4, 1, 16, 16), out.shape

    ref = jax.block_until_ready(_reference_forward(x, sigma))
    np.testing.assert_allclose(np.asarray(out), np.asarray(ref), rtol=1e-5, atol=1e-5)

    print("KERNEL_OK")
</pallas_src>

<mosaic_0001>
module attributes {stable_mosaic.version = 11 : i64} {
  func.func @_blur_kernel(%arg0: i32, %arg1: memref<2x23x23xf32, #tpu.memory_space<vmem>>, %arg2: memref<2x16x16xf32, #tpu.memory_space<vmem>>, %arg3: memref<2x16x23xf32, #tpu.memory_space<vmem>>) attributes {dimension_semantics = [#tpu.dimension_semantics<parallel>], iteration_bounds = array<i64: 2>, scalar_prefetch = 0 : i64, scratch_operands = 1 : i64, tpu.core_type = #tpu.core_type<tc>, window_params = [{transform_indices = @transform_0, window_bounds = array<i64: 2, 23, 23>}, {transform_indices = @transform_1, window_bounds = array<i64: 2, 16, 16>}]} {
    %c0 = arith.constant 0 : index
    %c0_0 = arith.constant 0 : index
    %c0_1 = arith.constant 0 : index
    %0 = vector.load %arg1[%c0, %c0_0, %c0_1] : memref<2x23x23xf32, #tpu.memory_space<vmem>>, vector<2x16x23xf32>
    %cst = arith.constant 0.00443304796 : f32
    %1 = vector.broadcast %cst : f32 to vector<2x16x23xf32>
    %2 = arith.mulf %1, %0 : vector<2x16x23xf32>
    %c0_2 = arith.constant 0 : index
    %c1 = arith.constant 1 : index
    %c0_3 = arith.constant 0 : index
    %3 = vector.load %arg1[%c0_2, %c1, %c0_3] : memref<2x23x23xf32, #tpu.memory_space<vmem>>, vector<2x16x23xf32>
    %cst_4 = arith.constant 0.0540055782 : f32
    %4 = vector.broadcast %cst_4 : f32 to vector<2x16x23xf32>
    %5 = arith.mulf %4, %3 : vector<2x16x23xf32>
    %6 = arith.addf %2, %5 : vector<2x16x23xf32>
    %c0_5 = arith.constant 0 : index
    %c2 = arith.constant 2 : index
    %c0_6 = arith.constant 0 : index
    %7 = vector.load %arg1[%c0_5, %c2, %c0_6] : memref<2x23x23xf32, #tpu.memory_space<vmem>>, vector<2x16x23xf32>
    %cst_7 = arith.constant 0.242036223 : f32
    %8 = vector.broadcast %cst_7 : f32 to vector<2x16x23xf32>
    %9 = arith.mulf %8, %7 : vector<2x16x23xf32>
    %10 = arith.addf %6, %9 : vector<2x16x23xf32>
    %c0_8 = arith.constant 0 : index
    %c3 = arith.constant 3 : index
    %c0_9 = arith.constant 0 : index
    %11 = vector.load %arg1[%c0_8, %c3, %c0_9] : memref<2x23x23xf32, #tpu.memory_space<vmem>>, vector<2x16x23xf32>
    %cst_10 = arith.constant 0.399050266 : f32
    %12 = vector.broadcast %cst_10 : f32 to vector<2x16x23xf32>
    %13 = arith.mulf %12, %11 : vector<2x16x23xf32>
    %14 = arith.addf %10, %13 : vector<2x16x23xf32>
    %c0_11 = arith.constant 0 : index
    %c4 = arith.constant 4 : index
    %c0_12 = arith.constant 0 : index
    %15 = vector.load %arg1[%c0_11, %c4, %c0_12] : memref<2x23x23xf32, #tpu.memory_space<vmem>>, vector<2x16x23xf32>
    %cst_13 = arith.constant 0.242036223 : f32
    %16 = vector.broadcast %cst_13 : f32 to vector<2x16x23xf32>
    %17 = arith.mulf %16, %15 : vector<2x16x23xf32>
    %18 = arith.addf %14, %17 : vector<2x16x23xf32>
    %c0_14 = arith.constant 0 : index
    %c5 = arith.constant 5 : index
    %c0_15 = arith.constant 0 : index
    %19 = vector.load %arg1[%c0_14, %c5, %c0_15] : memref<2x23x23xf32, #tpu.memory_space<vmem>>, vector<2x16x23xf32>
    %cst_16 = arith.constant 0.0540055782 : f32
    %20 = vector.broadcast %cst_16 : f32 to vector<2x16x23xf32>
    %21 = arith.mulf %20, %19 : vector<2x16x23xf32>
    %22 = arith.addf %18, %21 : vector<2x16x23xf32>
    %c0_17 = arith.constant 0 : index
    %c6 = arith.constant 6 : index
    %c0_18 = arith.constant 0 : index
    %23 = vector.load %arg1[%c0_17, %c6, %c0_18] : memref<2x23x23xf32, #tpu.memory_space<vmem>>, vector<2x16x23xf32>
    %cst_19 = arith.constant 0.00443304796 : f32
    %24 = vector.broadcast %cst_19 : f32 to vector<2x16x23xf32>
    %25 = arith.mulf %24, %23 : vector<2x16x23xf32>
    %26 = arith.addf %22, %25 : vector<2x16x23xf32>
    %c0_20 = arith.constant 0 : index
    %c0_21 = arith.constant 0 : index
    %c0_22 = arith.constant 0 : index
    %27 = vector.load %arg3[%c0_20, %c0_21, %c0_22] : memref<2x16x23xf32, #tpu.memory_space<vmem>>, vector<2x16x23xf32>
    tpu.vector_store %arg3[%c0_20, %c0_21, %c0_22], %26 {strides = array<i32>} : memref<2x16x23xf32, #tpu.memory_space<vmem>>, vector<2x16x23xf32>,
    %c0_23 = arith.constant 0 : index
    %c0_24 = arith.constant 0 : index
    %c0_25 = arith.constant 0 : index
    %28 = vector.load %arg3[%c0_23, %c0_24, %c0_25] : memref<2x16x23xf32, #tpu.memory_space<vmem>>, vector<2x16x16xf32>
    %cst_26 = arith.constant 0.00443304796 : f32
    %29 = vector.broadcast %cst_26 : f32 to vector<2x16x16xf32>
    %30 = arith.mulf %29, %28 : vector<2x16x16xf32>
    %c0_27 = arith.constant 0 : index
    %c0_28 = arith.constant 0 : index
    %c1_29 = arith.constant 1 : index
    %31 = vector.load %arg3[%c0_27, %c0_28, %c1_29] : memref<2x16x23xf32, #tpu.memory_space<vmem>>, vector<2x16x16xf32>
    %cst_30 = arith.constant 0.0540055782 : f32
    %32 = vector.broadcast %cst_30 : f32 to vector<2x16x16xf32>
    %33 = arith.mulf %32, %31 : vector<2x16x16xf32>
    %34 = arith.addf %30, %33 : vector<2x16x16xf32>
    %c0_31 = arith.constant 0 : index
    %c0_32 = arith.constant 0 : index
    %c2_33 = arith.constant 2 : index
    %35 = vector.load %arg3[%c0_31, %c0_32, %c2_33] : memref<2x16x23xf32, #tpu.memory_space<vmem>>, vector<2x16x16xf32>
    %cst_34 = arith.constant 0.242036223 : f32
    %36 = vector.broadcast %cst_34 : f32 to vector<2x16x16xf32>
    %37 = arith.mulf %36, %35 : vector<2x16x16xf32>
    %38 = arith.addf %34, %37 : vector<2x16x16xf32>
    %c0_35 = arith.constant 0 : index
    %c0_36 = arith.constant 0 : index
    %c3_37 = arith.constant 3 : index
    %39 = vector.load %arg3[%c0_35, %c0_36, %c3_37] : memref<2x16x23xf32, #tpu.memory_space<vmem>>, vector<2x16x16xf32>
    %cst_38 = arith.constant 0.399050266 : f32
    %40 = vector.broadcast %cst_38 : f32 to vector<2x16x16xf32>
    %41 = arith.mulf %40, %39 : vector<2x16x16xf32>
    %42 = arith.addf %38, %41 : vector<2x16x16xf32>
    %c0_39 = arith.constant 0 : index
    %c0_40 = arith.constant 0 : index
    %c4_41 = arith.constant 4 : index
    %43 = vector.load %arg3[%c0_39, %c0_40, %c4_41] : memref<2x16x23xf32, #tpu.memory_space<vmem>>, vector<2x16x16xf32>
    %cst_42 = arith.constant 0.242036223 : f32
    %44 = vector.broadcast %cst_42 : f32 to vector<2x16x16xf32>
    %45 = arith.mulf %44, %43 : vector<2x16x16xf32>
    %46 = arith.addf %42, %45 : vector<2x16x16xf32>
    %c0_43 = arith.constant 0 : index
    %c0_44 = arith.constant 0 : index
    %c5_45 = arith.constant 5 : index
    %47 = vector.load %arg3[%c0_43, %c0_44, %c5_45] : memref<2x16x23xf32, #tpu.memory_space<vmem>>, vector<2x16x16xf32>
    %cst_46 = arith.constant 0.0540055782 : f32
    %48 = vector.broadcast %cst_46 : f32 to vector<2x16x16xf32>
    %49 = arith.mulf %48, %47 : vector<2x16x16xf32>
    %50 = arith.addf %46, %49 : vector<2x16x16xf32>
    %c0_47 = arith.constant 0 : index
    %c0_48 = arith.constant 0 : index
    %c6_49 = arith.constant 6 : index
    %51 = vector.load %arg3[%c0_47, %c0_48, %c6_49] : memref<2x16x23xf32, #tpu.memory_space<vmem>>, vector<2x16x16xf32>
    %cst_50 = arith.constant 0.00443304796 : f32
    %52 = vector.broadcast %cst_50 : f32 to vector<2x16x16xf32>
    %53 = arith.mulf %52, %51 : vector<2x16x16xf32>
    %54 = arith.addf %50, %53 : vector<2x16x16xf32>
    %c0_51 = arith.constant 0 : index
    %c0_52 = arith.constant 0 : index
    %c0_53 = arith.constant 0 : index
    %55 = vector.load %arg2[%c0_51, %c0_52, %c0_53] : memref<2x16x16xf32, #tpu.memory_space<vmem>>, vector<2x16x16xf32>
    tpu.vector_store %arg2[%c0_51, %c0_52, %c0_53], %54 {strides = array<i32>} : memref<2x16x16xf32, #tpu.memory_space<vmem>>, vector<2x16x16xf32>,
    return
  }
  func.func @transform_0(%arg0: i32) -> (i32, i32, i32) {
    %c0_i32 = arith.constant 0 : i32
    %c0_i32_0 = arith.constant 0 : i32
    %c0_i32_1 = arith.constant 0 : i32
    return %arg0, %c0_i32, %c0_i32_0 : i32, i32, i32
  }
  func.func @transform_1(%arg0: i32) -> (i32, i32, i32) {
    %c0_i32 = arith.constant 0 : i32
    %c0_i32_0 = arith.constant 0 : i32
    %c0_i32_1 = arith.constant 0 : i32
    return %arg0, %c0_i32, %c0_i32_0 : i32, i32, i32
  }
}

</mosaic_0001>

<llo_original>
// kernel: tpu_custom_call.1
$region0: #{tpu_custom_call.1}
  #allocation0 [shape = 'u32[]', space=smem, size = 0x4, offset = 0x4, fixed_abs, tag = 'smem constant byte address 0x4 - core index']
  #allocation1 [shape = 'u32[144,128]{1,0:T(1,128)}', space=vmem, size = 0x12000, scoped, tag = 'internal scratch']
  #allocation2 [shape = 'f32[2,16,23]{2,1,0:T(8,128)}', space=vmem, size = 0x4000, scoped, tag = 'scratch operand']
  %s0 = inlined_call_operand.vmem [shape: f32[4,23,23], index: 0, kind: input, shape index: {}]
  %s1 = inlined_call_operand.hbm [shape: f32[4,16,16], index: 1, kind: output, shape index: {}]
  %s2 = sld [smem:[#allocation0]]
  $region37: #{tpu_custom_call.1} parent=0
    _
  %s4 = ssub.s32 1, %s2
  %s5 = scalar_select 0, %s4, %s2
  $region1: #{tpu_custom_call.1} parent=0
    #allocation3 [shape = 'u8[32768]{0}', space=vmem, size = 0x8000, scoped, tag = 'output window, operand 0']
    #allocation4 [shape = 's32[2]{0}', space=sflag, size = 0x8, scoped, tag = 'scoped memory for tpu_custom_call.1']
    %6 = vsyncpa [#allocation4], 0
    %s7 = scalar_lea.sflag [#allocation4], 1
    %8 = vsyncpa %s7, 0
    loop: start=0, step=1, limit=4
    $region2: #{tpu_custom_call.1} parent=1 // loop_pre_header
      _
    $region3: #{tpu_custom_call.1} parent=1 // loop_header
      %s10 = sphi 0, %s14
      %p11 = scmp.ge.s32.totalorder %s10, 4
      %s20 = sphi 0, %s22
      %s23 = sphi 0, %s20
      %s24 = sphi 0, %s23
      %s40 = sphi 0, %s24
      %s46 = sphi 0, %s48
      %s49 = sphi 0, %s46
      %s50 = sphi 0, %s49
      %s66 = sphi 0, %s50
    $region4: #{tpu_custom_call.1} parent=1 // loop_header_branch
      %13 = sbr.rel (%p11) target = $region8
    $region5: #{tpu_custom_call.1} parent=1 // loop_body
      %s15 = ssub.s32 %s10, 1
      %s16 = ssub.s32 %s10, 2
      %s17 = sadd.s32 %s10, 1
      %s18 = ssub.s32 %s10, %s17
      %p19 = scmp.eq.s32.totalorder %s18, 0
      %s21 = sadd.s32 %s20, 1
      %s22 = scalar_select %p19, %s20, %s21
      %p25 = pneg %p19
      %p26 = scmp.eq.s32.totalorder %s10, 1
      %p27 = por %p25, %p26
      %p28 = scmp.ne.s32.totalorder %s20, %s23
      %p29 = scmp.eq.s32.totalorder %s10, 0
      %p30 = por %p28, %p29
      %p31 = scmp.ne.s32.totalorder %s20, %s23
      %p32 = scmp.eq.s32.totalorder %s15, 1
      %p33 = por %p31, %p32
      %p34 = scmp.ne.s32.totalorder %s23, %s24
      %p35 = scmp.eq.s32.totalorder %s15, 0
      %p36 = por %p34, %p35
      %p37 = scmp.ne.s32.totalorder %s23, %s24
      %p38 = scmp.eq.s32.totalorder %s16, 1
      %p39 = por %p37, %p38
      %p41 = scmp.ne.s32.totalorder %s24, %s40
      %p42 = scmp.eq.s32.totalorder %s16, 0
      %p43 = por %p41, %p42
      %s44 = ssub.s32 %s10, %s17
      %p45 = scmp.eq.s32.totalorder %s44, 0
      %s47 = sadd.s32 %s46, 1
      %s48 = scalar_select %p45, %s46, %s47
      %p51 = pneg %p45
      %p52 = scmp.eq.s32.totalorder %s10, 1
      %p53 = por %p51, %p52
      %p54 = scmp.ne.s32.totalorder %s46, %s49
      %p55 = scmp.eq.s32.totalorder %s10, 0
      %p56 = por %p54, %p55
      %p57 = scmp.ne.s32.totalorder %s46, %s49
      %p58 = scmp.eq.s32.totalorder %s15, 1
      %p59 = por %p57, %p58
      %p60 = scmp.ne.s32.totalorder %s49, %s50
      %p61 = scmp.eq.s32.totalorder %s15, 0
      %p62 = por %p60, %p61
      %p63 = scmp.ne.s32.totalorder %s49, %s50
      %p64 = scmp.eq.s32.totalorder %s16, 1
      %p65 = por %p63, %p64
      %p67 = scmp.ne.s32.totalorder %s50, %s66
      %p68 = scmp.eq.s32.totalorder %s16, 0
      %p69 = por %p67, %p68
      %p70 = scmp.le.s32.totalorder 1, %s10
      %p71 = scmp.lt.s32.totalorder %s10, 3
      %p72 = pnand %p70, %p71
      %p73 = pneg %p72
      // Predicated region
      $region9: #{tpu_custom_call.1} parent=5 // pred_check
        _
      $region10: #{tpu_custom_call.1} parent=5 // pred_check_branch
        %75 = sbr.rel (%p72) target = $region12
      $region11: #{tpu_custom_call.1} parent=5 // pred_region
        %s76 = ssub.s32 %s10, 1
      $region12: #{tpu_custom_call.1} parent=5 // pred_fallthru
        _
      %p77 = scmp.lt.s32.totalorder %s10, 2
      // Predicated region
      $region13: #{tpu_custom_call.1} parent=5 // pred_check
        %p78 = pneg %p77
      $region14: #{tpu_custom_call.1} parent=5 // pred_check_branch
        %80 = sbr.rel (%p78) target = $region16
      $region15: #{tpu_custom_call.1} parent=5 // pred_region
        // Predicated region
        $region17: #{tpu_custom_call.1} parent=15 // pred_check
          %p81 = pneg %p30
        $region18: #{tpu_custom_call.1} parent=15 // pred_check_branch
          %83 = sbr.rel (%p81) target = $region20
        $region19: #{tpu_custom_call.1} parent=15 // pred_region
          %s84 = smul.u32 2, %s10
          %p85 = scmp.lt.s32.totalorder %s84, 3
          %s86 = scalar_select %p85, %s84, 3
          %s87 = smul.addr %s86, 3
          %s88 = smul.addr %s87, 8
          %s89 = scalar_lea.vmem %s0, %s88
          %s90 = smul.u32 2, %s10
        $region20: #{tpu_custom_call.1} parent=15 // pred_fallthru
          _
      $region16: #{tpu_custom_call.1} parent=5 // pred_fallthru
        _
      %p91 = scmp.le.s32.totalorder 1, %s10
      %p92 = scmp.lt.s32.totalorder %s10, 3
      %p93 = pnand %p91, %p92
      %p94 = pneg %p93
      // Predicated region
      $region21: #{tpu_custom_call.1} parent=5 // pred_check
        _
      $region22: #{tpu_custom_call.1} parent=5 // pred_check_branch
        %96 = sbr.rel (%p93) target = $region24
      $region23: #{tpu_custom_call.1} parent=5 // pred_region
        %s97 = ssub.s32 %s10, 1
        %s98 = smul.u32 2, %s15
        %p99 = scmp.lt.s32.totalorder %s98, 3
        %s100 = scalar_select %p99, %s98, 3
        %s101 = smul.addr %s100, 3
        %s102 = smul.addr %s101, 8
        %s103 = scalar_lea.vmem %s0, %s102
        %p104 = pneg %p36
        %p105 = pneg %p33
        %p106 = pneg %p62
        %p107 = pneg %p59
        %s108 = sand.u32 %s49, 1
        %s109 = scalar_lea.sflag [#allocation4], %s108
        %s110 = sand.u32 %s49, 1
        %s111 = smul.addr %s110, 32
        %s112 = scalar_lea.vmem [#allocation3], %s111
        %s113 = smul.u32 2, %s15
        %p114 = scmp.lt.s32.totalorder %s113, 3
        %s115 = scalar_select %p114, %s113, 3
        %s116 = smul.addr %s115, 3
        %s117 = smul.addr %s116, 8
        %s118 = scalar_lea.vmem %s0, %s117
        %s119 = smul.u32 2, %s15
        %s120 = smul.u32 2, %s15
        %v121 = vld [vmem:[%s118] sm:$0xff]
        %v122 = vld [vmem:[%s118 + $0x8] sm:$0xff]
        %v123 = vld [vmem:[%s118 + $0x18] sm:$0xff]
        %v124 = vld [vmem:[%s118 + $0x20] sm:$0xff]
        %v125 = vmul.f32 %v121, 0.004433048
        %v126 = vmul.f32 %v122, 0.004433048
        %v127 = vmul.f32 %v123, 0.004433048
        %v128 = vmul.f32 %v124, 0.004433048
        %v129 = vld [vmem:[%s118 + $0x1] sm:$0xff]
        %v130 = vld [vmem:[%s118 + $0x9] sm:$0xff]
        %v131 = vld [vmem:[%s118 + $0x19] sm:$0xff]
        %v132 = vld [vmem:[%s118 + $0x21] sm:$0xff]
        %v133 = vmul.f32 %v129, 0.05400558
        %v134 = vmul.f32 %v130, 0.05400558
        %v135 = vmul.f32 %v131, 0.05400558
        %v136 = vmul.f32 %v132, 0.05400558
        %v137 = vadd.f32 %v125, %v133
        %v138 = vadd.f32 %v126, %v134
        %v139 = vadd.f32 %v127, %v135
        %v140 = vadd.f32 %v128, %v136
        %v141 = vld [vmem:[%s118 + $0x2] sm:$0xff]
        %v142 = vld [vmem:[%s118 + $0xa] sm:$0xff]
        %v143 = vld [vmem:[%s118 + $0x1a] sm:$0xff]
        %v144 = vld [vmem:[%s118 + $0x22] sm:$0xff]
        %v145 = vmul.f32 %v141, 0.24203622
        %v146 = vmul.f32 %v142, 0.24203622
        %v147 = vmul.f32 %v143, 0.24203622
        %v148 = vmul.f32 %v144, 0.24203622
        %v149 = vadd.f32 %v137, %v145
        %v150 = vadd.f32 %v138, %v146
        %v151 = vadd.f32 %v139, %v147
        %v152 = vadd.f32 %v140, %v148
        %v153 = vld [vmem:[%s118 + $0x3] sm:$0xff]
        %v154 = vld [vmem:[%s118 + $0xb] sm:$0xff]
        %v155 = vld [vmem:[%s118 + $0x1b] sm:$0xff]
        %v156 = vld [vmem:[%s118 + $0x23] sm:$0xff]
        %v157 = vmul.f32 %v153, 0.39905027
        %v158 = vmul.f32 %v154, 0.39905027
        %v159 = vmul.f32 %v155, 0.39905027
        %v160 = vmul.f32 %v156, 0.39905027
        %v161 = vadd.f32 %v149, %v157
        %v162 = vadd.f32 %v150, %v158
        %v163 = vadd.f32 %v151, %v159
        %v164 = vadd.f32 %v152, %v160
        %v165 = vld [vmem:[%s118 + $0x4] sm:$0xff]
        %v166 = vld [vmem:[%s118 + $0xc] sm:$0xff]
        %v167 = vld [vmem:[%s118 + $0x1c] sm:$0xff]
        %v168 = vld [vmem:[%s118 + $0x24] sm:$0xff]
        %v169 = vmul.f32 %v165, 0.24203622
        %v170 = vmul.f32 %v166, 0.24203622
        %v171 = vmul.f32 %v167, 0.24203622
        %v172 = vmul.f32 %v168, 0.24203622
        %v173 = vadd.f32 %v161, %v169
        %v174 = vadd.f32 %v162, %v170
        %v175 = vadd.f32 %v163, %v171
        %v176 = vadd.f32 %v164, %v172
        %v177 = vld [vmem:[%s118 + $0x5] sm:$0xff]
        %v178 = vld [vmem:[%s118 + $0xd] sm:$0xff]
        %v179 = vld [vmem:[%s118 + $0x1d] sm:$0xff]
        %v180 = vld [vmem:[%s118 + $0x25] sm:$0xff]
        %v181 = vmul.f32 %v177, 0.05400558
        %v182 = vmul.f32 %v178, 0.05400558
        %v183 = vmul.f32 %v179, 0.05400558
        %v184 = vmul.f32 %v180, 0.05400558
        %v185 = vadd.f32 %v173, %v181
        %v186 = vadd.f32 %v174, %v182
        %v187 = vadd.f32 %v175, %v183
        %v188 = vadd.f32 %v176, %v184
        %v189 = vld [vmem:[%s118 + $0x6] sm:$0xff]
        %v190 = vld [vmem:[%s118 + $0xe] sm:$0xff]
        %v191 = vld [vmem:[%s118 + $0x1e] sm:$0xff]
        %v192 = vld [vmem:[%s118 + $0x26] sm:$0xff]
        %v193 = vmul.f32 %v189, 0.004433048
        %v194 = vmul.f32 %v190, 0.004433048
        %v195 = vmul.f32 %v191, 0.004433048
        %v196 = vmul.f32 %v192, 0.004433048
        %v197 = vadd.f32 %v185, %v193
        %v198 = vadd.f32 %v186, %v194
        %v199 = vadd.f32 %v187, %v195
        %v200 = vadd.f32 %v188, %v196
        %vm201 = vcmask 187392
        %202 = vst.msk [vmem:[#allocation2] sm:$0xff] %vm201, %v197
        %203 = vst.msk [vmem:[#allocation2 + $0x8] sm:$0xff] %vm201, %v198
        %204 = vst.msk [vmem:[#allocation2 + $0x10] sm:$0xff] %vm201, %v199
        %205 = vst.msk [vmem:[#allocation2 + $0x18] sm:$0xff] %vm201, %v200
        %v206 = vld [vmem:[#allocation2] sm:$0xff]
        %v207 = vld [vmem:[#allocation2 + $0x8] sm:$0xff]
        %v208 = vld [vmem:[#allocation2 + $0x10] sm:$0xff]
        %v209 = vld [vmem:[#allocation2 + $0x18] sm:$0xff]
        %v210 = vmul.f32 %v206, 0.004433048
        %v211 = vmul.f32 %v207, 0.004433048
        %v212 = vmul.f32 %v208, 0.004433048
        %v213 = vmul.f32 %v209, 0.004433048
        %v214 = vmul.f32 %v206, 0.05400558
        %v215 = vmul.f32 %v207, 0.05400558
        %v216 = vmul.f32 %v208, 0.05400558
        %v217 = vmul.f32 %v209, 0.05400558
        %222 = vrot.lane.b32.xlu0 %v214, 127
        %v223 = vpop.permute.xlu0 %222
        %224 = vrot.lane.b32.xlu0 %v215, 127
        %v225 = vpop.permute.xlu0 %224
        %226 = vrot.lane.b32.xlu0 %v216, 127
        %v227 = vpop.permute.xlu0 %226
        %228 = vrot.lane.b32.xlu0 %v217, 127
        %v229 = vpop.permute.xlu0 %228
        %v234 = vadd.f32 %v210, %v223
        %v235 = vadd.f32 %v211, %v225
        %v236 = vadd.f32 %v212, %v227
        %v237 = vadd.f32 %v213, %v229
        %v238 = vmul.f32 %v206, 0.24203622
        %v239 = vmul.f32 %v207, 0.24203622
        %v240 = vmul.f32 %v208, 0.24203622
        %v241 = vmul.f32 %v209, 0.24203622
        %246 = vrot.lane.b32.xlu0 %v238, 126
        %v247 = vpop.permute.xlu0 %246
        %248 = vrot.lane.b32.xlu0 %v239, 126
        %v249 = vpop.permute.xlu0 %248
        %250 = vrot.lane.b32.xlu0 %v240, 126
        %v251 = vpop.permute.xlu0 %250
        %252 = vrot.lane.b32.xlu0 %v241, 126
        %v253 = vpop.permute.xlu0 %252
        %v258 = vadd.f32 %v234, %v247
        %v259 = vadd.f32 %v235, %v249
        %v260 = vadd.f32 %v236, %v251
        %v261 = vadd.f32 %v237, %v253
        %v262 = vmul.f32 %v206, 0.39905027
        %v263 = vmul.f32 %v207, 0.39905027
        %v264 = vmul.f32 %v208, 0.39905027
        %v265 = vmul.f32 %v209, 0.39905027
        %270 = vrot.lane.b32.xlu0 %v262, 125
        %v271 = vpop.permute.xlu0 %270
        %272 = vrot.lane.b32.xlu0 %v263, 125
        %v273 = vpop.permute.xlu0 %272
        %274 = vrot.lane.b32.xlu0 %v264, 125
        %v275 = vpop.permute.xlu0 %274
        %276 = vrot.lane.b32.xlu0 %v265, 125
        %v277 = vpop.permute.xlu0 %276
        %v282 = vadd.f32 %v258, %v271
        %v283 = vadd.f32 %v259, %v273
        %v284 = vadd.f32 %v260, %v275
        %v285 = vadd.f32 %v261, %v277
        %286 = vrot.lane.b32.xlu0 %v238, 124
        %v287 = vpop.permute.xlu0 %286
        %288 = vrot.lane.b32.xlu0 %v239, 124
        %v289 = vpop.permute.xlu0 %288
        %290 = vrot.lane.b32.xlu0 %v240, 124
        %v291 = vpop.permute.xlu0 %290
        %292 = vrot.lane.b32.xlu0 %v241, 124
        %v293 = vpop.permute.xlu0 %292
        %v298 = vadd.f32 %v282, %v287
        %v299 = vadd.f32 %v283, %v289
        %v300 = vadd.f32 %v284, %v291
        %v301 = vadd.f32 %v285, %v293
        %302 = vrot.lane.b32.xlu0 %v214, 123
        %v303 = vpop.permute.xlu0 %302
        %304 = vrot.lane.b32.xlu0 %v215, 123
        %v305 = vpop.permute.xlu0 %304
        %306 = vrot.lane.b32.xlu0 %v216, 123
        %v307 = vpop.permute.xlu0 %306
        %308 = vrot.lane.b32.xlu0 %v217, 123
        %v309 = vpop.permute.xlu0 %308
        %v314 = vadd.f32 %v298, %v303
        %v315 = vadd.f32 %v299, %v305
        %v316 = vadd.f32 %v300, %v307
        %v317 = vadd.f32 %v301, %v309
        %322 = vrot.lane.b32.xlu0 %v210, 122
        %v323 = vpop.permute.xlu0 %322
        %324 = vrot.lane.b32.xlu0 %v211, 122
        %v325 = vpop.permute.xlu0 %324
        %326 = vrot.lane.b32.xlu0 %v212, 122
        %v327 = vpop.permute.xlu0 %326
        %328 = vrot.lane.b32.xlu0 %v213, 122
        %v329 = vpop.permute.xlu0 %328
        %v334 = vadd.f32 %v314, %v323
        %v335 = vadd.f32 %v315, %v325
        %v336 = vadd.f32 %v316, %v327
        %v337 = vadd.f32 %v317, %v329
        %vm338 = vcmask 130048
        %339 = vst.msk [vmem:[%s112] sm:$0xff] %vm338, %v334
        %340 = vst.msk [vmem:[%s112 + $0x8] sm:$0xff] %vm338, %v335
        %341 = vst.msk [vmem:[%s112 + $0x10] sm:$0xff] %vm338, %v336
        %342 = vst.msk [vmem:[%s112 + $0x18] sm:$0xff] %vm338, %v337
        %s343 = sand.u32 %s49, 1
        %s344 = scalar_lea.sflag [#allocation4], %s343
        %s345 = sand.u32 %s49, 1
        %s346 = smul.addr %s345, 32
        %s347 = scalar_lea.vmem [#allocation3], %s346
        // Predicated region
        $region25: #{tpu_custom_call.1} parent=23 // pred_check
          %p348 = pneg %p59
        $region26: #{tpu_custom_call.1} parent=23 // pred_check_branch
          %350 = sbr.rel (%p348) target = $region28
        $region27: #{tpu_custom_call.1} parent=23 // pred_region
          %s351 = smul.u32 2, %s15
          %s353 = ssub.s32 512, 512
          %354 = vsyncadd %s344, %s353
          %s355 = smul.addr %s351, 2
          %s356 = smul.addr %s355, 128
          %s357 = scalar_lea.hbm %s1, %s356
          %s358 = sshll.u32 %s347, 4
          %s359 = int_to_ptr.vmem [resolvable:$true] %s358
          %364 = dma.vmem_to_hbm [thread:$0]  %s359, 512, %s357, %s344, 128, 128, 8
        $region28: #{tpu_custom_call.1} parent=23 // pred_fallthru
          _
      $region24: #{tpu_custom_call.1} parent=5 // pred_fallthru
        _
      %p365 = scmp.le.s32.totalorder 2, %s10
      // Predicated region
      $region29: #{tpu_custom_call.1} parent=5 // pred_check
        %p366 = pneg %p365
      $region30: #{tpu_custom_call.1} parent=5 // pred_check_branch
        %368 = sbr.rel (%p366) target = $region32
      $region31: #{tpu_custom_call.1} parent=5 // pred_region
        %s369 = ssub.s32 %s10, 2
        // Predicated region
        $region33: #{tpu_custom_call.1} parent=31 // pred_check
          %p370 = pneg %p65
        $region34: #{tpu_custom_call.1} parent=31 // pred_check_branch
          %372 = sbr.rel (%p370) target = $region36
        $region35: #{tpu_custom_call.1} parent=31 // pred_region
          %s373 = sand.u32 %s50, 1
          %s374 = scalar_lea.sflag [#allocation4], %s373
          %s375 = sand.u32 %s50, 1
          %s376 = smul.addr %s375, 32
          %s377 = scalar_lea.vmem [#allocation3], %s376
          %378 = dma.done %s374, 512
        $region36: #{tpu_custom_call.1} parent=31 // pred_fallthru
          _
      $region32: #{tpu_custom_call.1} parent=5 // pred_fallthru
        _
    $region6: #{tpu_custom_call.1} parent=1 // loop_footer
      %s14 = sadd.s32 1, %s10
    $region7: #{tpu_custom_call.1} parent=1 // loop_footer_branch
      %9 = sbr.rel target = $region3
    $region8: #{tpu_custom_call.1} parent=1 // loop_exit
      _
    %379 = vsyncpa [#allocation4], 1
    %s380 = scalar_lea.sflag [#allocation4], 1
    %381 = vsyncpa %s380, 1

</llo_original>
